<compile_context>
chip_gen: v5e
topology: v5e:2x2
jax: 0.10.0
libtpu: 0.0.40
codegen_flags: <defaults>
</compile_context>

<pallas_src>
import functools
import math

import jax
import jax.numpy as jnp
from jax.experimental import pallas as pl
from jax.experimental.pallas import tpu as pltpu

_LANES = 128
_EPS_LO = 1e-8
_EPS_HI = 1e-6   # 1 - 1e-8 == 1.0 in float32; 1 - 1e-6 is representable.


def _elementwise_contrib(p, t, c1, c2, gamma):
    """Per-element 5*focal + smooth_l1 with the 5*alpha constants folded in."""
    p32 = p.astype(jnp.float32)
    t32 = t.astype(jnp.float32)
    p_c = jnp.clip(p32, _EPS_LO, 1.0 - _EPS_HI)
    d = p32 - t32
    ad = jnp.abs(d)
    sl1 = jnp.where(ad < 1.0, 0.5 * d * d, ad - 0.5)
    return (sl1
            - c1 * (t32 * (1.0 - p_c) ** gamma * jnp.log(p_c))
            - c2 * ((1.0 - t32) * p_c ** gamma * jnp.log(1.0 - p_c)))


def _focal_l1_kernel(pred_ref, targ_ref, out_ref, *,
                     c1, c2, gamma, valid_rows, tile_rows, acc_rows, inner):
    c = pl.program_id(0)          # chunk axis ("parallel"; megacore sharding on v7x)
    i = pl.program_id(1)          # reduction axis ("arbitrary")

    @pl.when(i == 0)
    def _():
        out_ref[...] = jnp.zeros_like(out_ref)

    tile_idx = c * inner + i
    row0 = tile_idx * tile_rows

    contrib = _elementwise_contrib(pred_ref[...], targ_ref[...], c1, c2, gamma)

    def _accumulate(x):
        # Reduce rows to an (acc_rows, 128) slab with pure VPU adds (several
        # independent chains) and accumulate into the resident output block.
        out_ref[...] += x.reshape(tile_rows // acc_rows, acc_rows, _LANES).sum(axis=0)

    # Interior tile (the common case): every row is valid -> no mask work at all.
    @pl.when(row0 + tile_rows <= valid_rows)
    def _():
        _accumulate(contrib)

    # Boundary tile: the partial last block holds garbage rows past valid_rows.
    # Select (not multiply) so NaN/Inf garbage contributes exactly 0.
    @pl.when(jnp.logical_and(row0 < valid_rows, row0 + tile_rows > valid_rows))
    def _():
        grow = row0 + jax.lax.broadcasted_iota(jnp.int32, contrib.shape, 0)
        _accumulate(jnp.where(grow < valid_rows, contrib, 0.0))

    # row0 >= valid_rows: clamped duplicate tile (index_map clamp) -> contribute nothing.


def _device_kind():
    try:
        return jax.devices()[0].device_kind.lower()
    except Exception:
        return ""


def focal_l1_loss(pred, target, *, alpha=0.5, gamma=4,
                  tile_rows=None, num_chunks=None):
    assert pred.shape == target.shape
    n = int(pred.size)
    assert n > 0

    # Fold the 5*focal scale into the alpha constants (static Python floats).
    c1 = 5.0 * float(alpha)
    c2 = 5.0 * (1.0 - float(alpha))
    g = float(gamma)
    # Keep gamma static; integral gamma lowers x**g to VPU multiplies (not exp/log).
    gamma_static = int(g) if g.is_integer() else g

    kind = _device_kind()
    if tile_rows is None:
        # 8192x128 f32 -> 4 MiB/input, 16 MiB double-buffered: fits v6e/v7x 32 MiB
        # default scoped VMEM.  4096 (8 MiB) stays safe inside v5e's 16 MiB default.
        tile_rows = 8192 if ("v6" in kind or "v7" in kind) else 4096
    if num_chunks is None:
        # Only v7x has 2 TensorCores per chip; elsewhere the parallel axis would just
        # be a serial loop whose index clamp can duplicate the last tile's DMA+compute.
        num_chunks = 2 if "v7" in kind else 1

    # Dtype-aware sublane multiple: (8,128) f32, (16,128) bf16, (32,128) int8/fp8.
    def _sub_mult(dt):
        return 8 * max(1, 4 // max(1, jnp.dtype(dt).itemsize))
    mult = max(_sub_mult(pred.dtype), _sub_mult(target.dtype))

    pf = pred.reshape(-1)
    tf = target.reshape(-1)

    r = n // _LANES                      # fully-populated lane-dense rows
    n_main = r * _LANES
    tail = n - n_main                    # <128-element ragged tail

    # Ragged tail: tiny plain-JAX term instead of materializing padded copies of both
    # inputs in HBM before the pallas_call.
    tail_sum = jnp.float32(0.0)
    if tail:
        tail_sum = jnp.sum(_elementwise_contrib(pf[n_main:], tf[n_main:],
                                                c1, c2, gamma_static))
        pf = pf[:n_main]
        tf = tf[:n_main]

    if r == 0:                           # everything fit in the tail
        return tail_sum * (1.0 / n)

    pf = pf.reshape(r, _LANES)
    tf = tf.reshape(r, _LANES)

    # Block sizing: a multiple of the dtype sublane tile, never larger than the array
    # (tiny inputs use the full-extent escape); a partial last block is masked in-kernel.
    if r < mult:
        tile_rows = r
    else:
        tile_rows = min(int(tile_rows), (r // mult) * mult)
    tiles_total = -(-r // tile_rows)

    num_chunks = int(max(1, min(int(num_chunks), tiles_total)))
    inner = -(-tiles_total // num_chunks)

    # Wider resident accumulator: up to 8 independent VALU add chains; gcd keeps it a
    # divisor of tile_rows and a multiple of 8.
    acc_rows = math.gcd(64, tile_rows)

    def in_map(c, i):
        # Clamp so logically-empty trailing tiles (skipped in-kernel) stay in bounds.
        return (jnp.minimum(c * inner + i, tiles_total - 1), 0)

    in_spec = pl.BlockSpec((tile_rows, _LANES), in_map)

    kernel = functools.partial(
        _focal_l1_kernel, c1=c1, c2=c2, gamma=gamma_static,
        valid_rows=r, tile_rows=tile_rows, acc_rows=acc_rows, inner=inner)

    partials = pl.pallas_call(
        kernel,
        out_shape=jax.ShapeDtypeStruct((num_chunks, acc_rows, _LANES), jnp.float32),
        grid_spec=pltpu.PrefetchScalarGridSpec(
            num_scalar_prefetch=0,
            grid=(num_chunks, inner),
            in_specs=[in_spec, in_spec],
            out_specs=pl.BlockSpec((None, acc_rows, _LANES), lambda c, i: (c, 0, 0)),
        ),
        compiler_params=pltpu.CompilerParams(
            dimension_semantics=("parallel", "arbitrary")),
    )(pf, tf)

    # Tiny final reduction (num_chunks * acc_rows * 128 elements) + mean normalization.
    return (jnp.sum(partials) + tail_sum) * (1.0 / n)


def _reference(pred, target, alpha=0.5, gamma=4):
    p = jnp.clip(pred.astype(jnp.float32), _EPS_LO, 1.0 - _EPS_HI)
    t = target.astype(jnp.float32)
    focal = -(alpha * t * (1.0 - p) ** gamma * jnp.log(p)
              + (1.0 - alpha) * (1.0 - t) * p ** gamma * jnp.log(1.0 - p))
    d = pred.astype(jnp.float32) - t
    ad = jnp.abs(d)
    sl1 = jnp.where(ad < 1.0, 0.5 * d * d, ad - 0.5)
    return 5.0 * jnp.mean(focal) + jnp.mean(sl1)


if __name__ == "__main__":
    key = jax.random.PRNGKey(0)
    k1, k2 = jax.random.split(key)
    # pred: sigmoid "probabilities", target: binary map, NCHW like the PyTorch module.
    pred = jax.nn.sigmoid(jax.random.normal(k1, (2, 4, 16, 16), dtype=jnp.float32))
    target = (jax.random.uniform(k2, (2, 4, 16, 16)) > 0.5).astype(jnp.float32)

    loss = focal_l1_loss(pred, target, alpha=0.5, gamma=4)
    loss = jax.block_until_ready(loss)

    ref = _reference(pred, target)
    assert jnp.allclose(loss, ref, rtol=1e-5, atol=1e-5), (loss, ref)
    print("KERNEL_OK")
</pallas_src>

<mosaic_0001>
module attributes {stable_mosaic.version = 11 : i64} {
  func.func @_focal_l1_kernel(%arg0: i32, %arg1: i32, %arg2: memref<16x128xf32, #tpu.memory_space<vmem>>, %arg3: memref<16x128xf32, #tpu.memory_space<vmem>>, %arg4: memref<1x16x128xf32, #tpu.memory_space<vmem>>) attributes {dimension_semantics = [#tpu.dimension_semantics<parallel>, #tpu.dimension_semantics<arbitrary>], iteration_bounds = array<i64: 1, 1>, scalar_prefetch = 0 : i64, scratch_operands = 0 : i64, tpu.core_type = #tpu.core_type<tc>, window_params = [{transform_indices = @transform_0, window_bounds = array<i64: 16, 128>}, {transform_indices = @transform_1, window_bounds = array<i64: 16, 128>}, {transform_indices = @transform_2, window_bounds = array<i64: 1, 16, 128>}]} {
    %c0_i32 = arith.constant 0 : i32
    %0 = arith.cmpi eq, %arg1, %c0_i32 : i32
    %1 = arith.extui %0 : i1 to i32
    %c0_i32_0 = arith.constant 0 : i32
    %2 = arith.cmpi ne, %1, %c0_i32_0 : i32
    scf.if %2 {
      %cst_20 = arith.constant 0.000000e+00 : f32
      %54 = vector.broadcast %cst_20 : f32 to vector<16x128xf32>
      %c0_21 = arith.constant 0 : index
      %c0_22 = arith.constant 0 : index
      %c0_23 = arith.constant 0 : index
      %55 = vector.load %arg4[%c0_21, %c0_22, %c0_23] : memref<1x16x128xf32, #tpu.memory_space<vmem>>, vector<1x16x128xf32>
      %56 = vector.shape_cast %55 : vector<1x16x128xf32> to vector<16x128xf32>
      %57 = vector.shape_cast %54 : vector<16x128xf32> to vector<1x16x128xf32>
      tpu.vector_store %arg4[%c0_21, %c0_22, %c0_23], %57 {strides = array<i32>} : memref<1x16x128xf32, #tpu.memory_space<vmem>>, vector<1x16x128xf32>,
    } else {
    }
    %c1_i32 = arith.constant 1 : i32
    %3 = arith.muli %arg0, %c1_i32 : i32
    %4 = arith.addi %3, %arg1 : i32
    %c16_i32 = arith.constant 16 : i32
    %5 = arith.muli %4, %c16_i32 : i32
    %c0 = arith.constant 0 : index
    %c0_1 = arith.constant 0 : index
    %6 = vector.load %arg2[%c0, %c0_1] : memref<16x128xf32, #tpu.memory_space<vmem>>, vector<16x128xf32>
    %c0_2 = arith.constant 0 : index
    %c0_3 = arith.constant 0 : index
    %7 = vector.load %arg3[%c0_2, %c0_3] : memref<16x128xf32, #tpu.memory_space<vmem>>, vector<16x128xf32>
    %cst = arith.constant 9.99999993E-9 : f32
    %cst_4 = arith.constant 0.999998986 : f32
    %8 = vector.broadcast %cst : f32 to vector<16x128xf32>
    %9 = arith.maximumf %8, %6 : vector<16x128xf32>
    %10 = vector.broadcast %cst_4 : f32 to vector<16x128xf32>
    %11 = arith.minimumf %10, %9 : vector<16x128xf32>
    %12 = arith.subf %6, %7 : vector<16x128xf32>
    %13 = math.absf %12 : vector<16x128xf32>
    %cst_5 = arith.constant 1.000000e+00 : f32
    %14 = vector.broadcast %cst_5 : f32 to vector<16x128xf32>
    %15 = arith.cmpf olt, %13, %14 : vector<16x128xf32>
    %cst_6 = arith.constant 5.000000e-01 : f32
    %16 = vector.broadcast %cst_6 : f32 to vector<16x128xf32>
    %17 = arith.mulf %16, %12 : vector<16x128xf32>
    %18 = arith.mulf %17, %12 : vector<16x128xf32>
    %cst_7 = arith.constant 5.000000e-01 : f32
    %19 = vector.broadcast %cst_7 : f32 to vector<16x128xf32>
    %20 = arith.subf %13, %19 : vector<16x128xf32>
    %21 = arith.select %15, %18, %20 : vector<16x128xi1>, vector<16x128xf32>
    %cst_8 = arith.constant 1.000000e+00 : f32
    %22 = vector.broadcast %cst_8 : f32 to vector<16x128xf32>
    %23 = arith.subf %22, %11 : vector<16x128xf32>
    %24 = arith.mulf %23, %23 : vector<16x128xf32>
    %25 = arith.mulf %24, %24 : vector<16x128xf32>
    %26 = arith.mulf %7, %25 : vector<16x128xf32>
    %27 = math.log %11 : vector<16x128xf32>
    %28 = arith.mulf %26, %27 : vector<16x128xf32>
    %cst_9 = arith.constant 2.500000e+00 : f32
    %29 = vector.broadcast %cst_9 : f32 to vector<16x128xf32>
    %30 = arith.mulf %29, %28 : vector<16x128xf32>
    %31 = arith.subf %21, %30 : vector<16x128xf32>
    %cst_10 = arith.constant 1.000000e+00 : f32
    %32 = vector.broadcast %cst_10 : f32 to vector<16x128xf32>
    %33 = arith.subf %32, %7 : vector<16x128xf32>
    %34 = arith.mulf %11, %11 : vector<16x128xf32>
    %35 = arith.mulf %34, %34 : vector<16x128xf32>
    %36 = arith.mulf %33, %35 : vector<16x128xf32>
    %cst_11 = arith.constant 1.000000e+00 : f32
    %37 = vector.broadcast %cst_11 : f32 to vector<16x128xf32>
    %38 = arith.subf %37, %11 : vector<16x128xf32>
    %39 = math.log %38 : vector<16x128xf32>
    %40 = arith.mulf %36, %39 : vector<16x128xf32>
    %cst_12 = arith.constant 2.500000e+00 : f32
    %41 = vector.broadcast %cst_12 : f32 to vector<16x128xf32>
    %42 = arith.mulf %41, %40 : vector<16x128xf32>
    %43 = arith.subf %31, %42 : vector<16x128xf32>
    %c16_i32_13 = arith.constant 16 : i32
    %44 = arith.addi %5, %c16_i32_13 : i32
    %c16_i32_14 = arith.constant 16 : i32
    %45 = arith.cmpi sle, %44, %c16_i32_14 : i32
    %46 = arith.extui %45 : i1 to i32
    %c0_i32_15 = arith.constant 0 : i32
    %47 = arith.cmpi ne, %46, %c0_i32_15 : i32
    scf.if %47 {
      %c0_20 = arith.constant 0 : index
      %c0_21 = arith.constant 0 : index
      %c0_22 = arith.constant 0 : index
      %54 = vector.load %arg4[%c0_20, %c0_21, %c0_22] : memref<1x16x128xf32, #tpu.memory_space<vmem>>, vector<1x16x128xf32>
      %55 = vector.shape_cast %54 : vector<1x16x128xf32> to vector<16x128xf32>
      %56 = vector.shape_cast %43 : vector<16x128xf32> to vector<1x16x128xf32>
      %cst_23 = arith.constant dense<0.000000e+00> : vector<16x128xf32>
      %57 = vector.multi_reduction <add>, %56, %cst_23 [0] : vector<1x16x128xf32> to vector<16x128xf32>
      %58 = arith.addf %55, %57 : vector<16x128xf32>
      %c0_24 = arith.constant 0 : index
      %c0_25 = arith.constant 0 : index
      %c0_26 = arith.constant 0 : index
      %59 = vector.load %arg4[%c0_24, %c0_25, %c0_26] : memref<1x16x128xf32, #tpu.memory_space<vmem>>, vector<1x16x128xf32>
      %60 = vector.shape_cast %59 : vector<1x16x128xf32> to vector<16x128xf32>
      %61 = vector.shape_cast %58 : vector<16x128xf32> to vector<1x16x128xf32>
      tpu.vector_store %arg4[%c0_24, %c0_25, %c0_26], %61 {strides = array<i32>} : memref<1x16x128xf32, #tpu.memory_space<vmem>>, vector<1x16x128xf32>,
    } else {
    }
    %c16_i32_16 = arith.constant 16 : i32
    %48 = arith.cmpi slt, %5, %c16_i32_16 : i32
    %c16_i32_17 = arith.constant 16 : i32
    %49 = arith.addi %5, %c16_i32_17 : i32
    %c16_i32_18 = arith.constant 16 : i32
    %50 = arith.cmpi sgt, %49, %c16_i32_18 : i32
    %51 = arith.andi %48, %50 : i1
    %52 = arith.extui %51 : i1 to i32
    %c0_i32_19 = arith.constant 0 : i32
    %53 = arith.cmpi ne, %52, %c0_i32_19 : i32
    scf.if %53 {
      %54 = tpu.iota {dimensions = array<i32: 0>} : vector<16x128xi32>
      %55 = vector.broadcast %5 : i32 to vector<16x128xi32>
      %56 = arith.addi %55, %54 : vector<16x128xi32>
      %c16_i32_20 = arith.constant 16 : i32
      %57 = vector.broadcast %c16_i32_20 : i32 to vector<16x128xi32>
      %58 = arith.cmpi slt, %56, %57 : vector<16x128xi32>
      %cst_21 = arith.constant 0.000000e+00 : f32
      %59 = vector.broadcast %cst_21 : f32 to vector<16x128xf32>
      %60 = arith.select %58, %43, %59 : vector<16x128xi1>, vector<16x128xf32>
      %c0_22 = arith.constant 0 : index
      %c0_23 = arith.constant 0 : index
      %c0_24 = arith.constant 0 : index
      %61 = vector.load %arg4[%c0_22, %c0_23, %c0_24] : memref<1x16x128xf32, #tpu.memory_space<vmem>>, vector<1x16x128xf32>
      %62 = vector.shape_cast %61 : vector<1x16x128xf32> to vector<16x128xf32>
      %63 = vector.shape_cast %60 : vector<16x128xf32> to vector<1x16x128xf32>
      %cst_25 = arith.constant dense<0.000000e+00> : vector<16x128xf32>
      %64 = vector.multi_reduction <add>, %63, %cst_25 [0] : vector<1x16x128xf32> to vector<16x128xf32>
      %65 = arith.addf %62, %64 : vector<16x128xf32>
      %c0_26 = arith.constant 0 : index
      %c0_27 = arith.constant 0 : index
      %c0_28 = arith.constant 0 : index
      %66 = vector.load %arg4[%c0_26, %c0_27, %c0_28] : memref<1x16x128xf32, #tpu.memory_space<vmem>>, vector<1x16x128xf32>
      %67 = vector.shape_cast %66 : vector<1x16x128xf32> to vector<16x128xf32>
      %68 = vector.shape_cast %65 : vector<16x128xf32> to vector<1x16x128xf32>
      tpu.vector_store %arg4[%c0_26, %c0_27, %c0_28], %68 {strides = array<i32>} : memref<1x16x128xf32, #tpu.memory_space<vmem>>, vector<1x16x128xf32>,
    } else {
    }
    return
  }
  func.func @transform_0(%arg0: i32, %arg1: i32) -> (i32, i32) {
    %c1_i32 = arith.constant 1 : i32
    %0 = arith.muli %arg0, %c1_i32 : i32
    %1 = arith.addi %0, %arg1 : i32
    %c0_i32 = arith.constant 0 : i32
    %2 = arith.minsi %1, %c0_i32 : i32
    %c0_i32_0 = arith.constant 0 : i32
    %c0_i32_1 = arith.constant 0 : i32
    return %2, %c0_i32_0 : i32, i32
  }
  func.func @transform_1(%arg0: i32, %arg1: i32) -> (i32, i32) {
    %c1_i32 = arith.constant 1 : i32
    %0 = arith.muli %arg0, %c1_i32 : i32
    %1 = arith.addi %0, %arg1 : i32
    %c0_i32 = arith.constant 0 : i32
    %2 = arith.minsi %1, %c0_i32 : i32
    %c0_i32_0 = arith.constant 0 : i32
    %c0_i32_1 = arith.constant 0 : i32
    return %2, %c0_i32_0 : i32, i32
  }
  func.func @transform_2(%arg0: i32, %arg1: i32) -> (i32, i32, i32) {
    %c0_i32 = arith.constant 0 : i32
    %c0_i32_0 = arith.constant 0 : i32
    %c0_i32_1 = arith.constant 0 : i32
    return %arg0, %c0_i32, %c0_i32_0 : i32, i32, i32
  }
}

</mosaic_0001>

<llo_original>
// kernel: tpu_custom_call.1
$region0: #{tpu_custom_call.1}
  #allocation0 [shape = 'u32[]', space=smem, size = 0x4, offset = 0x4, fixed_abs, tag = 'smem constant byte address 0x4 - core index']
  #allocation1 [shape = 'u32[72,128]{1,0:T(1,128)}', space=vmem, size = 0x9000, scoped, tag = 'internal scratch']
  %s0 = inlined_call_operand.hbm [shape: f32[16,128], index: 0, kind: input, shape index: {}]
  %s1 = inlined_call_operand.hbm [shape: f32[16,128], index: 1, kind: input, shape index: {}]
  %s2 = inlined_call_operand.hbm [shape: f32[1,16,128], index: 2, kind: output, shape index: {}]
  %s3 = sld [smem:[#allocation0]]
  $region38: #{tpu_custom_call.1} parent=0
    _
  %s5 = ssub.s32 1, %s3
  %s6 = scalar_select 0, %s5, %s3
  $region1: #{tpu_custom_call.1} parent=0
    #allocation2 [shape = 'u8[8192]{0}', space=vmem, size = 0x2000, scoped, tag = 'input window, operand 0, single buffered']
    #allocation3 [shape = 's32[1]{0}', space=sflag, size = 0x4, scoped, tag = 'scoped memory for tpu_custom_call.1']
    #allocation4 [shape = 's32[1]{0}', space=sflag, size = 0x4, scoped, tag = 'scoped memory for tpu_custom_call.1']
    #allocation5 [shape = 'u8[8192]{0}', space=vmem, size = 0x2000, scoped, tag = 'input window, operand 1, single buffered']
    #allocation6 [shape = 's32[1]{0}', space=sflag, size = 0x4, scoped, tag = 'scoped memory for tpu_custom_call.1']
    #allocation7 [shape = 'u8[8192]{0}', space=vmem, size = 0x2000, scoped, tag = 'output window, operand 0, single buffered']
    %7 = vsyncpa [#allocation3], 0
    %8 = vsyncpa [#allocation6], 0
    %9 = vsyncpa [#allocation4], 0
    // Predicated region
    $region2: #{tpu_custom_call.1} parent=1 // pred_check
      _
    $region3: #{tpu_custom_call.1} parent=1 // pred_check_branch
      %11 = sbr.rel (0) target = $region5
    $region4: #{tpu_custom_call.1} parent=1 // pred_region
      %s12 = sadd.s32 0, 0
      %p13 = scmp.lt.s32.totalorder %s12, 0
      %s14 = scalar_select %p13, %s12, 0
      %s15 = smul.u32 2, %s14
      %17 = vsyncadd [#allocation3], 0
      %s18 = smul.addr %s15, 8
      %s19 = scalar_lea.hbm %s0, %s18
      %s20 = sshll.u32 %s19, 4
      %s21 = int_to_ptr.hbm [resolvable:$true] %s20
      %s22 = sshll.u32 [#allocation2], 4
      %s23 = int_to_ptr.vmem [resolvable:$true] %s22
      %28 = dma.hbm_to_vmem [thread:$0]  %s21, 256, %s23, [#allocation3], 128, 128, 8
    $region5: #{tpu_custom_call.1} parent=1 // pred_fallthru
      _
    // Predicated region
    $region6: #{tpu_custom_call.1} parent=1 // pred_check
      _
    $region7: #{tpu_custom_call.1} parent=1 // pred_check_branch
      %30 = sbr.rel (0) target = $region9
    $region8: #{tpu_custom_call.1} parent=1 // pred_region
      %s31 = sadd.s32 0, 0
      %p32 = scmp.lt.s32.totalorder %s31, 0
      %s33 = scalar_select %p32, %s31, 0
      %s34 = smul.u32 2, %s33
      %36 = vsyncadd [#allocation6], 0
      %s37 = smul.addr %s34, 8
      %s38 = scalar_lea.hbm %s1, %s37
      %s39 = sshll.u32 %s38, 4
      %s40 = int_to_ptr.hbm [resolvable:$true] %s39
      %s41 = sshll.u32 [#allocation5], 4
      %s42 = int_to_ptr.vmem [resolvable:$true] %s41
      %47 = dma.hbm_to_vmem [thread:$0]  %s40, 256, %s42, [#allocation6], 128, 128, 8
    $region9: #{tpu_custom_call.1} parent=1 // pred_fallthru
      _
    // Predicated region
    $region10: #{tpu_custom_call.1} parent=1 // pred_check
      _
    $region11: #{tpu_custom_call.1} parent=1 // pred_check_branch
      %49 = sbr.rel (0) target = $region13
    $region12: #{tpu_custom_call.1} parent=1 // pred_region
      %51 = dma.done [#allocation3], 256
    $region13: #{tpu_custom_call.1} parent=1 // pred_fallthru
      _
    // Predicated region
    $region14: #{tpu_custom_call.1} parent=1 // pred_check
      _
    $region15: #{tpu_custom_call.1} parent=1 // pred_check_branch
      %53 = sbr.rel (0) target = $region17
    $region16: #{tpu_custom_call.1} parent=1 // pred_region
      %55 = dma.done [#allocation6], 256
    $region17: #{tpu_custom_call.1} parent=1 // pred_fallthru
      _
    %s56 = sadd.s32 0, 0
    %p57 = scmp.lt.s32.totalorder %s56, 0
    %s58 = scalar_select %p57, %s56, 0
    %s59 = smul.u32 2, %s58
    %s60 = sadd.s32 0, 0
    %p61 = scmp.lt.s32.totalorder %s60, 0
    %s62 = scalar_select %p61, %s60, 0
    %s63 = smul.u32 2, %s62
    %p64 = scmp.eq.s32.totalorder 0, 0
    // Predicated region
    $region18: #{tpu_custom_call.1} parent=1 // pred_check
      %p65 = pneg %p64
    $region19: #{tpu_custom_call.1} parent=1 // pred_check_branch
      %67 = sbr.rel (%p65) target = $region21
    $region20: #{tpu_custom_call.1} parent=1 // pred_region
      %68 = vst [vmem:[#allocation7] sm:$0xff] 0.0
      %69 = vst [vmem:[#allocation7 + $0x8] sm:$0xff] 0.0
    $region21: #{tpu_custom_call.1} parent=1 // pred_fallthru
      _
    %s70 = sadd.s32 0, 0
    %s71 = smul.u32 %s70, 16
    %v72 = vld [vmem:[#allocation2] sm:$0xff]
    %v73 = vld [vmem:[#allocation2 + $0x8] sm:$0xff]
    %v74 = vld [vmem:[#allocation5] sm:$0xff]
    %v75 = vld [vmem:[#allocation5 + $0x8] sm:$0xff]
    %v76 = vmax.f32 %v72, 1e-08
    %v77 = vmax.f32 %v73, 1e-08
    %v78 = vmin.f32 %v76, 0.999999
    %v79 = vmin.f32 %v77, 0.999999
    %v80 = vsub.f32 %v72, %v74
    %v81 = vsub.f32 %v73, %v75
    %v82 = vand.u32 2147483647, %v80
    %v83 = vand.u32 2147483647, %v81
    %vm84 = vcmp.lt.f32.partialorder %v82, 1.0
    %vm85 = vcmp.lt.f32.partialorder %v83, 1.0
    %v86 = vmul.f32 %v80, 0.5
    %v87 = vmul.f32 %v81, 0.5
    %v88 = vmul.f32 %v86, %v80
    %v89 = vmul.f32 %v87, %v81
    %v90 = vsub.f32 %v82, 0.5
    %v91 = vsub.f32 %v83, 0.5
    %v92 = vsel %vm84, %v88, %v90
    %v93 = vsel %vm85, %v89, %v91
    %v94 = vsub.f32 1.0, %v78
    %v95 = vsub.f32 1.0, %v79
    %v96 = vmul.f32 %v94, %v94
    %v97 = vmul.f32 %v95, %v95
    %v98 = vmul.f32 %v96, %v96
    %v99 = vmul.f32 %v97, %v97
    %v100 = vmul.f32 %v74, %v98
    %v101 = vmul.f32 %v75, %v99
    %v102 = vlog2.pop %v78
    %v103 = vmul.f32 %v102, 0.6931472
    %v104 = vlog2.pop %v79
    %v105 = vmul.f32 %v104, 0.6931472
    %v106 = vmul.f32 %v100, %v103
    %v107 = vmul.f32 %v101, %v105
    %v108 = vmul.f32 %v106, 2.5
    %v109 = vmul.f32 %v107, 2.5
    %v110 = vsub.f32 %v92, %v108
    %v111 = vsub.f32 %v93, %v109
    %v112 = vsub.f32 1.0, %v74
    %v113 = vsub.f32 1.0, %v75
    %v114 = vmul.f32 %v78, %v78
    %v115 = vmul.f32 %v79, %v79
    %v116 = vmul.f32 %v114, %v114
    %v117 = vmul.f32 %v115, %v115
    %v118 = vmul.f32 %v112, %v116
    %v119 = vmul.f32 %v113, %v117
    %v120 = vlog2.pop %v94
    %v121 = vmul.f32 %v120, 0.6931472
    %v122 = vlog2.pop %v95
    %v123 = vmul.f32 %v122, 0.6931472
    %v124 = vmul.f32 %v118, %v121
    %v125 = vmul.f32 %v119, %v123
    %v126 = vmul.f32 %v124, 2.5
    %v127 = vmul.f32 %v125, 2.5
    %v128 = vsub.f32 %v110, %v126
    %v129 = vsub.f32 %v111, %v127
    %s130 = sadd.s32 %s71, 16
    %p131 = scmp.le.s32.totalorder %s130, 16
    // Predicated region
    $region22: #{tpu_custom_call.1} parent=1 // pred_check
      %p132 = pneg %p131
    $region23: #{tpu_custom_call.1} parent=1 // pred_check_branch
      %134 = sbr.rel (%p132) target = $region25
    $region24: #{tpu_custom_call.1} parent=1 // pred_region
      %v135 = vld [vmem:[#allocation7] sm:$0xff]
      %v136 = vld [vmem:[#allocation7 + $0x8] sm:$0xff]
      %v137 = vadd.f32 %v128, 0.0
      %v138 = vadd.f32 %v129, 0.0
      %v139 = vadd.f32 %v135, %v137
      %v140 = vadd.f32 %v136, %v138
      %141 = vst [vmem:[#allocation7] sm:$0xff] %v139
      %142 = vst [vmem:[#allocation7 + $0x8] sm:$0xff] %v140
    $region25: #{tpu_custom_call.1} parent=1 // pred_fallthru
      _
    %p143 = scmp.lt.s32.totalorder %s71, 16
    %p144 = scmp.gt.s32.totalorder %s130, 16
    %p145 = pnand %p143, %p144
    %p146 = pneg %p145
    // Predicated region
    $region26: #{tpu_custom_call.1} parent=1 // pred_check
      _
    $region27: #{tpu_custom_call.1} parent=1 // pred_check_branch
      %148 = sbr.rel (%p145) target = $region29
    $region28: #{tpu_custom_call.1} parent=1 // pred_region
      %v149 = vlaneseq
      %v150 = vshrl.u32 %v149, 7
      %v151 = vadd.s32 %v150, 8
      %v152 = vstv %s71
      %v153 = vadd.s32 %v152, %v150
      %v154 = vadd.s32 %v152, %v151
      %vm155 = vcmp.lt.s32.totalorder %v153, 16
      %vm156 = vcmp.lt.s32.totalorder %v154, 16
      %v157 = vsel %vm155, %v128, 0.0
      %v158 = vsel %vm156, %v129, 0.0
      %v159 = vld [vmem:[#allocation7] sm:$0xff]
      %v160 = vld [vmem:[#allocation7 + $0x8] sm:$0xff]
      %v161 = vadd.f32 %v157, 0.0
      %v162 = vadd.f32 %v158, 0.0
      %v163 = vadd.f32 %v159, %v161
      %v164 = vadd.f32 %v160, %v162
      %165 = vst [vmem:[#allocation7] sm:$0xff] %v163
      %166 = vst [vmem:[#allocation7 + $0x8] sm:$0xff] %v164
    $region29: #{tpu_custom_call.1} parent=1 // pred_fallthru
      _
    // Predicated region
    $region30: #{tpu_custom_call.1} parent=1 // pred_check
      _
    $region31: #{tpu_custom_call.1} parent=1 // pred_check_branch
      %168 = sbr.rel (0) target = $region33
    $region32: #{tpu_custom_call.1} parent=1 // pred_region
      %170 = vsyncadd [#allocation4], 0
      %s171 = sshll.u32 [#allocation7], 4
      %s172 = int_to_ptr.vmem [resolvable:$true] %s171
      %s173 = sshll.u32 %s2, 4
      %s174 = int_to_ptr.hbm [resolvable:$true] %s173
      %179 = dma.vmem_to_hbm [thread:$0]  %s172, 256, %s174, [#allocation4], 128, 128, 8
    $region33: #{tpu_custom_call.1} parent=1 // pred_fallthru
      _
    // Predicated region
    $region34: #{tpu_custom_call.1} parent=1 // pred_check
      _
    $region35: #{tpu_custom_call.1} parent=1 // pred_check_branch
      %181 = sbr.rel (0) target = $region37
    $region36: #{tpu_custom_call.1} parent=1 // pred_region
      %183 = dma.done [#allocation4], 256
    $region37: #{tpu_custom_call.1} parent=1 // pred_fallthru
      _
    %184 = vsyncpa [#allocation3], 1
    %185 = vsyncpa [#allocation6], 1
    %186 = vsyncpa [#allocation4], 1

</llo_original>
